<compile_context>
chip_gen: v6e
topology: v6e:2x2x1
jax: 0.10.0
libtpu: 0.0.40
codegen_flags: <defaults>
</compile_context>

<pallas_src>
import math
import numpy as np
import jax
import jax.numpy as jnp
from jax.experimental import pallas as pl
from jax.experimental.pallas import tpu as pltpu

_INV_SQRT2 = 1.0 / math.sqrt(2.0)


# ---------------------------------------------------------------------------
# DWT analysis matrices (replicates DWT_2D.get_matrix() for wavename='haar')
# ---------------------------------------------------------------------------
def _haar_matrices_np(in_h: int, in_w: int):
    band_low = np.array([_INV_SQRT2, _INV_SQRT2], dtype=np.float64)
    band_high = np.array([_INV_SQRT2, -_INV_SQRT2], dtype=np.float64)
    band_length = 2
    band_length_half = 1

    L1 = max(in_h, in_w)
    L = math.floor(L1 / 2)
    matrix_h = np.zeros((L, L1 + band_length - 2), dtype=np.float64)
    matrix_g = np.zeros((L1 - L, L1 + band_length - 2), dtype=np.float64)
    end = None if band_length_half == 1 else -band_length_half + 1

    index = 0
    for i in range(L):
        for j in range(band_length):
            matrix_h[i, index + j] = band_low[j]
        index += 2
    matrix_h_0 = matrix_h[0:math.floor(in_h / 2), 0:in_h + band_length - 2]
    matrix_h_1 = matrix_h[0:math.floor(in_w / 2), 0:in_w + band_length - 2]

    index = 0
    for i in range(L1 - L):
        for j in range(band_length):
            matrix_g[i, index + j] = band_high[j]
        index += 2
    matrix_g_0 = matrix_g[0:in_h - math.floor(in_h / 2), 0:in_h + band_length - 2]
    matrix_g_1 = matrix_g[0:in_w - math.floor(in_w / 2), 0:in_w + band_length - 2]

    matrix_h_0 = matrix_h_0[:, band_length_half - 1:end]
    matrix_h_1 = np.transpose(matrix_h_1[:, band_length_half - 1:end])
    matrix_g_0 = matrix_g_0[:, band_length_half - 1:end]
    matrix_g_1 = np.transpose(matrix_g_1[:, band_length_half - 1:end])

    # matrix_low_0: (H/2, H); matrix_low_1: (W, W/2); matrix_high_0: (H/2, H);
    # matrix_high_1: (W, W/2)  -- all float64.
    return matrix_h_0, matrix_h_1, matrix_g_0, matrix_g_1


def haar_dwt_matrices(in_h: int, in_w: int):
    return tuple(jnp.asarray(m, jnp.float32) for m in _haar_matrices_np(in_h, in_w))


# ---------------------------------------------------------------------------
# Kernels
# ---------------------------------------------------------------------------
def _dwt_kernel_split(xp_ref, wm_ref, ll_ref, lh_ref, hl_ref, hh_ref):
    # xp_ref : (T, 2W)  row pairs packed along lanes: [x[2i,:] | x[2i+1,:]]
    # wm_ref : (W, W)   fused, pre-scaled W-stage matrix [low_1 | high_1] * 1/sqrt(2)
    # outputs: four (T, W/2) band tiles (used only when (W/2) % 128 == 0).
    W = wm_ref.shape[0]
    Wh = W // 2

    xp = xp_ref[...]
    even = xp[:, :W]                      # x[2i, :]
    odd = xp[:, W:]                       # x[2i+1, :]

    # Haar H-stage on the VPU (scale folded into wm -> just add/sub).
    L = even + odd
    Hb = even - odd

    wm = wm_ref[...]
    llh = jnp.dot(L, wm, preferred_element_type=jnp.float32)    # [LL | LH]
    hlh = jnp.dot(Hb, wm, preferred_element_type=jnp.float32)   # [HL | HH]

    ll_ref[...] = llh[:, :Wh].astype(ll_ref.dtype)
    lh_ref[...] = llh[:, Wh:].astype(lh_ref.dtype)
    hl_ref[...] = hlh[:, :Wh].astype(hl_ref.dtype)
    hh_ref[...] = hlh[:, Wh:].astype(hh_ref.dtype)


def _dwt_kernel_packed(xp_ref, wm_ref, out_ref):
    # xp_ref : (T, 2W)   out_ref: (T, 2W) packed [LL | LH | HL | HH] along lanes.
    W = wm_ref.shape[0]

    xp = xp_ref[...]
    even = xp[:, :W]
    odd = xp[:, W:]

    L = even + odd
    Hb = even - odd

    wm = wm_ref[...]
    # Store matmul results straight into lane halves of the output (no concatenate,
    # no full-tile temporary).
    out_ref[:, :W] = jnp.dot(L, wm, preferred_element_type=jnp.float32).astype(out_ref.dtype)
    out_ref[:, W:] = jnp.dot(Hb, wm, preferred_element_type=jnp.float32).astype(out_ref.dtype)


# ---------------------------------------------------------------------------
# Tiling / VMEM heuristics (generation-aware)
# ---------------------------------------------------------------------------
def _vmem_budget():
    """Returns (target input-tile bytes, vmem_limit_bytes) based on the chip generation."""
    try:
        cap = pltpu.get_tpu_info().vmem_capacity_bytes
    except Exception:
        cap = 64 * 1024 * 1024  # conservative (v7x-sized) default
    if cap >= 96 * 1024 * 1024:            # v5e / v6e: 128 MiB physical VMEM
        return 12 * 1024 * 1024, 96 * 1024 * 1024
    else:                                   # v7x: 64 MiB physical VMEM
        return 6 * 1024 * 1024, 56 * 1024 * 1024


def _choose_tile_rows(R: int, row_bytes: int, target_bytes: int) -> int:
    """Row-tile size: multiple of 8, sized to the VMEM budget, with a preference for
    >= 8 grid steps (pipelining + both v7x TensorCores) unless that would force tiles
    below 256 rows."""
    tile = max(8, (target_bytes // max(row_bytes, 1)) // 8 * 8)
    cap_for_steps = (R // 8) // 8 * 8
    if cap_for_steps >= 256:
        tile = min(tile, cap_for_steps)
    if tile >= R:
        return R              # single block covering the full row dim (always legal)
    return tile               # multiple of 8; last block may be padded (stores dropped)


# ---------------------------------------------------------------------------
# Wrapper
# ---------------------------------------------------------------------------
def dwt_2d_pallas(x):
    """x: (N, C, H, W) float32 -> (LL, LH, HL, HH), each (N, C, H//2, W//2)."""
    N, C, H, W = x.shape
    assert H % 2 == 0 and W % 2 == 0, "haar DWT Pallas kernel supports even H and W only"
    Hh, Wh = H // 2, W // 2
    B = N * C
    R = B * Hh                       # total independent output rows

    # Fused W-stage matrix [low_1 | high_1] with the H-stage 1/sqrt(2) folded in
    # (entries become exactly +-0.5 after the f64 product -> f32 cast).
    _, lo1, _, hi1 = _haar_matrices_np(H, W)
    wm = jnp.asarray(np.concatenate([lo1, hi1], axis=1) * _INV_SQRT2, jnp.float32)  # (W, W)

    # Row pairs packed along the lane dim; contiguous reshape (no HBM copy).
    xp = x.reshape(R, 2 * W)

    target_tile_bytes, vmem_limit = _vmem_budget()
    itemsize = np.dtype(x.dtype).itemsize
    tile_rows = _choose_tile_rows(R, 2 * W * itemsize, target_tile_bytes)
    grid = (pl.cdiv(R, tile_rows),)

    # The fused matrix never changes across grid steps; single-buffer it for large W to
    # reclaim ~4*W^2 bytes of VMEM (matters most under v7x's 64 MiB).
    wm_spec_kwargs = {}
    if W >= 512:
        wm_spec_kwargs["pipeline_mode"] = pl.Buffered(1)
    wm_spec = pl.BlockSpec((W, W), lambda r: (0, 0), **wm_spec_kwargs)

    in_specs = [
        pl.BlockSpec((tile_rows, 2 * W), lambda r: (r, 0)),   # packed input rows
        wm_spec,                                              # fused W matrix
    ]
    compiler_params = pltpu.CompilerParams(
        dimension_semantics=("parallel",),
        vmem_limit_bytes=vmem_limit,
    )

    if Wh % 128 == 0:
        # Lane-dense per-band outputs: no post-kernel band-slicing HBM pass.
        band_shape = jax.ShapeDtypeStruct((R, Wh), x.dtype)
        band_spec = pl.BlockSpec((tile_rows, Wh), lambda r: (r, 0))
        ll, lh, hl, hh = pl.pallas_call(
            _dwt_kernel_split,
            out_shape=(band_shape, band_shape, band_shape, band_shape),
            grid_spec=pltpu.PrefetchScalarGridSpec(
                num_scalar_prefetch=0,
                grid=grid,
                in_specs=in_specs,
                out_specs=(band_spec, band_spec, band_spec, band_spec),
            ),
            compiler_params=compiler_params,
        )(xp, wm)
        reshape = lambda a: a.reshape(N, C, Hh, Wh)           # contiguous -> free
        return reshape(ll), reshape(lh), reshape(hl), reshape(hh)

    # Small-W path: single packed output [LL | LH | HL | HH] along lanes, split in the
    # wrapper (2W is too narrow for dense per-band stores anyway).
    out = pl.pallas_call(
        _dwt_kernel_packed,
        out_shape=jax.ShapeDtypeStruct((R, 2 * W), x.dtype),
        grid_spec=pltpu.PrefetchScalarGridSpec(
            num_scalar_prefetch=0,
            grid=grid,
            in_specs=in_specs,
            out_specs=pl.BlockSpec((tile_rows, 2 * W), lambda r: (r, 0)),
        ),
        compiler_params=compiler_params,
    )(xp, wm)

    LL = out[:, 0 * Wh:1 * Wh].reshape(N, C, Hh, Wh)
    LH = out[:, 1 * Wh:2 * Wh].reshape(N, C, Hh, Wh)
    HL = out[:, 2 * Wh:3 * Wh].reshape(N, C, Hh, Wh)
    HH = out[:, 3 * Wh:4 * Wh].reshape(N, C, Hh, Wh)
    return LL, LH, HL, HH


# ---------------------------------------------------------------------------
# Pure-JAX reference mirroring DWTFunction_2D.forward (matrix formulation)
# ---------------------------------------------------------------------------
def dwt_2d_reference(x):
    N, C, H, W = x.shape
    lo0, lo1, hi0, hi1 = haar_dwt_matrices(H, W)
    L = jnp.einsum('hk,nckw->nchw', lo0, x)
    Hb = jnp.einsum('hk,nckw->nchw', hi0, x)
    LL = jnp.einsum('nchw,wv->nchv', L, lo1)
    LH = jnp.einsum('nchw,wv->nchv', L, hi1)
    HL = jnp.einsum('nchw,wv->nchv', Hb, lo1)
    HH = jnp.einsum('nchw,wv->nchv', Hb, hi1)
    return LL, LH, HL, HH


if __name__ == "__main__":
    key = jax.random.PRNGKey(0)
    N, C, H, W = 2, 4, 16, 16
    x = jax.random.normal(key, (N, C, H, W), dtype=jnp.float32)

    outs = dwt_2d_pallas(x)
    outs = jax.block_until_ready(outs)

    refs = dwt_2d_reference(x)
    for o, r in zip(outs, refs):
        assert o.shape == (N, C, H // 2, W // 2)
        np.testing.assert_allclose(np.asarray(o), np.asarray(r), rtol=1e-5, atol=1e-5)

    print("KERNEL_OK")
</pallas_src>

<mosaic_0001>
module attributes {stable_mosaic.version = 11 : i64} {
  func.func @_dwt_kernel_packed(%arg0: i32, %arg1: memref<64x32xf32, #tpu.memory_space<vmem>>, %arg2: memref<16x16xf32, #tpu.memory_space<vmem>>, %arg3: memref<64x32xf32, #tpu.memory_space<vmem>>) attributes {dimension_semantics = [#tpu.dimension_semantics<parallel>], iteration_bounds = array<i64: 1>, scalar_prefetch = 0 : i64, scratch_operands = 0 : i64, tpu.core_type = #tpu.core_type<tc>, window_params = [{transform_indices = @transform_0, window_bounds = array<i64: 64, 32>}, {pipeline_mode = #tpu.pipeline_mode<synchronous>, transform_indices = @transform_1, window_bounds = array<i64: 16, 16>}, {transform_indices = @transform_2, window_bounds = array<i64: 64, 32>}]} {
    %c0 = arith.constant 0 : index
    %c0_0 = arith.constant 0 : index
    %0 = vector.load %arg1[%c0, %c0_0] : memref<64x32xf32, #tpu.memory_space<vmem>>, vector<64x32xf32>
    %1 = vector.extract_strided_slice %0 {offsets = [0, 0], sizes = [64, 16], strides = [1, 1]} : vector<64x32xf32> to vector<64x16xf32>
    %2 = vector.extract_strided_slice %0 {offsets = [0, 16], sizes = [64, 16], strides = [1, 1]} : vector<64x32xf32> to vector<64x16xf32>
    %3 = arith.addf %1, %2 : vector<64x16xf32>
    %4 = arith.subf %1, %2 : vector<64x16xf32>
    %c0_1 = arith.constant 0 : index
    %c0_2 = arith.constant 0 : index
    %5 = vector.load %arg2[%c0_1, %c0_2] : memref<16x16xf32, #tpu.memory_space<vmem>>, vector<16x16xf32>
    %cst = arith.constant dense<0.000000e+00> : vector<64x16xf32>
    %6 = tpu.matmul %3, %5, %cst {dimension_numbers = #tpu.dot_dimension_numbers<[1], [0], [0], [1], [0, 0, 1, 1], [], []>} : vector<64x16xf32>, vector<16x16xf32>, vector<64x16xf32> -> vector<64x16xf32>
    %c0_3 = arith.constant 0 : index
    %c0_4 = arith.constant 0 : index
    %7 = vector.load %arg3[%c0_3, %c0_4] : memref<64x32xf32, #tpu.memory_space<vmem>>, vector<64x16xf32>
    tpu.vector_store %arg3[%c0_3, %c0_4], %6 {strides = array<i32>} : memref<64x32xf32, #tpu.memory_space<vmem>>, vector<64x16xf32>,
    %cst_5 = arith.constant dense<0.000000e+00> : vector<64x16xf32>
    %8 = tpu.matmul %4, %5, %cst_5 {dimension_numbers = #tpu.dot_dimension_numbers<[1], [0], [0], [1], [0, 0, 1, 1], [], []>} : vector<64x16xf32>, vector<16x16xf32>, vector<64x16xf32> -> vector<64x16xf32>
    %c0_6 = arith.constant 0 : index
    %c16 = arith.constant 16 : index
    %9 = vector.load %arg3[%c0_6, %c16] : memref<64x32xf32, #tpu.memory_space<vmem>>, vector<64x16xf32>
    tpu.vector_store %arg3[%c0_6, %c16], %8 {strides = array<i32>} : memref<64x32xf32, #tpu.memory_space<vmem>>, vector<64x16xf32>,
    return
  }
  func.func @transform_0(%arg0: i32) -> (i32, i32) {
    %c0_i32 = arith.constant 0 : i32
    %c0_i32_0 = arith.constant 0 : i32
    return %arg0, %c0_i32 : i32, i32
  }
  func.func @transform_1(%arg0: i32) -> (i32, i32) {
    %c0_i32 = arith.constant 0 : i32
    %c0_i32_0 = arith.constant 0 : i32
    %c0_i32_1 = arith.constant 0 : i32
    return %c0_i32, %c0_i32_0 : i32, i32
  }
  func.func @transform_2(%arg0: i32) -> (i32, i32) {
    %c0_i32 = arith.constant 0 : i32
    %c0_i32_0 = arith.constant 0 : i32
    return %arg0, %c0_i32 : i32, i32
  }
}

</mosaic_0001>

<llo_original>
// kernel: tpu_custom_call.1
$region0: #{tpu_custom_call.1}
  #allocation0 [shape = 'u32[]', space=smem, size = 0x4, offset = 0x4, fixed_abs, tag = 'smem constant byte address 0x4 - core index']
  #allocation1 [shape = 'u32[144,128]{1,0:T(1,128)}', space=vmem, size = 0x12000, scoped, tag = 'internal scratch']
  %s0 = inlined_call_operand.vmem [shape: f32[64,32], index: 0, kind: input, shape index: {}]
  %s1 = inlined_call_operand.vmem [shape: f32[16,16], index: 1, kind: input, shape index: {}]
  %s2 = inlined_call_operand.vmem [shape: f32[64,32], index: 2, kind: output, shape index: {}]
  %s3 = sld [smem:[#allocation0]]
  $region18: #{tpu_custom_call.1} parent=0
    _
  %s5 = ssub.s32 1, %s3
  %s6 = scalar_select 0, %s5, %s3
  // Predicated region
  $region2: #{tpu_custom_call.1} parent=0 // pred_check
    _
  $region3: #{tpu_custom_call.1} parent=0 // pred_check_branch
    %8 = sbr.rel (0) target = $region5
  $region4: #{tpu_custom_call.1} parent=0 // pred_region
    _
  $region5: #{tpu_custom_call.1} parent=0 // pred_fallthru
    _
  // Predicated region
  $region6: #{tpu_custom_call.1} parent=0 // pred_check
    _
  $region7: #{tpu_custom_call.1} parent=0 // pred_check_branch
    %10 = sbr.rel (0) target = $region9
  $region8: #{tpu_custom_call.1} parent=0 // pred_region
    _
  $region9: #{tpu_custom_call.1} parent=0 // pred_fallthru
    _
  %v11 = vld [vmem:[%s0] sm:$0xff]
  %v12 = vld [vmem:[%s0 + $0x8] sm:$0xff]
  %v13 = vld [vmem:[%s0 + $0x10] sm:$0xff]
  %v14 = vld [vmem:[%s0 + $0x18] sm:$0xff]
  %v15 = vld [vmem:[%s0 + $0x20] sm:$0xff]
  %v16 = vld [vmem:[%s0 + $0x28] sm:$0xff]
  %v17 = vld [vmem:[%s0 + $0x30] sm:$0xff]
  %v18 = vld [vmem:[%s0 + $0x38] sm:$0xff]
  %27 = vrot.lane.b32.xlu0 %v11, 112
  %v28 = vpop.permute.xlu0 %27
  %29 = vrot.lane.b32.xlu0 %v12, 112
  %v30 = vpop.permute.xlu0 %29
  %31 = vrot.lane.b32.xlu0 %v13, 112
  %v32 = vpop.permute.xlu0 %31
  %33 = vrot.lane.b32.xlu0 %v14, 112
  %v34 = vpop.permute.xlu0 %33
  %35 = vrot.lane.b32.xlu0 %v15, 112
  %v36 = vpop.permute.xlu0 %35
  %37 = vrot.lane.b32.xlu0 %v16, 112
  %v38 = vpop.permute.xlu0 %37
  %39 = vrot.lane.b32.xlu0 %v17, 112
  %v40 = vpop.permute.xlu0 %39
  %41 = vrot.lane.b32.xlu0 %v18, 112
  %v42 = vpop.permute.xlu0 %41
  %v51 = vadd.f32 %v11, %v28
  %v52 = vadd.f32 %v12, %v30
  %v53 = vadd.f32 %v13, %v32
  %v54 = vadd.f32 %v14, %v34
  %v55 = vadd.f32 %v15, %v36
  %v56 = vadd.f32 %v16, %v38
  %v57 = vadd.f32 %v17, %v40
  %v58 = vadd.f32 %v18, %v42
  %v59 = vsub.f32 %v11, %v28
  %v60 = vsub.f32 %v12, %v30
  %v61 = vsub.f32 %v13, %v32
  %v62 = vsub.f32 %v14, %v34
  %v63 = vsub.f32 %v15, %v36
  %v64 = vsub.f32 %v16, %v38
  %v65 = vsub.f32 %v17, %v40
  %v66 = vsub.f32 %v18, %v42
  %v67 = vld [vmem:[%s1] sm:$0xff]
  %v68 = vld [vmem:[%s1 + $0x8] sm:$0xff]
  %vm69 = vcmask 130048
  %v71 = vsel %vm69, %v51, 0
  %v74 = vsel %vm69, %v52, 0
  %v77 = vsel %vm69, %v53, 0
  %v80 = vsel %vm69, %v54, 0
  %v83 = vsel %vm69, %v55, 0
  %v86 = vsel %vm69, %v56, 0
  %v89 = vsel %vm69, %v57, 0
  %v92 = vsel %vm69, %v58, 0
  %94 = vmatprep.subr.mxu0 0.0
  %95 = vmatpush1.msra.mxu0 0.0
  %96 = vmatprep.subr.mxu0 0.0
  %97 = vmatpush1.msra.mxu0 0.0
  %98 = vmatprep.subr.mxu0 0.0
  %99 = vmatpush1.msra.mxu0 0.0
  %100 = vmatprep.subr.mxu0 0.0
  %101 = vmatpush1.msra.mxu0 0.0
  %102 = vmatprep.subr.mxu0 0.0
  %103 = vmatpush1.msra.mxu0 0.0
  %104 = vmatprep.subr.mxu0 0.0
  %105 = vmatpush1.msra.mxu0 0.0
  %106 = vmatprep.subr.mxu0 0.0
  %107 = vmatpush1.msra.mxu0 0.0
  %108 = vmatprep.subr.mxu0 0.0
  %109 = vmatpush1.msra.mxu0 0.0
  %110 = vmatprep.subr.mxu0 0.0
  %111 = vmatpush1.msra.mxu0 0.0
  %112 = vmatprep.subr.mxu0 0.0
  %113 = vmatpush1.msra.mxu0 0.0
  %114 = vmatprep.subr.mxu0 0.0
  %115 = vmatpush1.msra.mxu0 0.0
  %116 = vmatprep.subr.mxu0 0.0
  %117 = vmatpush1.msra.mxu0 0.0
  %118 = vmatprep.subr.mxu0 0.0
  %119 = vmatpush1.msra.mxu0 0.0
  %120 = vmatprep.subr.mxu0 0.0
  %121 = vmatpush1.msra.mxu0 0.0
  %122 = vmatprep.subr.mxu0 0.0
  %123 = vmatpush1.msra.mxu0 %v68
  %124 = vmatprep.subr.mxu0 0.0
  %125 = vmatpush1.msra.mxu0 %v67
  %126 = vmatprep.subr.mxu0 0.0
  %127 = vmatpush2.msra.mxu0 0.0
  %128 = vmatprep.subr.mxu0 0.0
  %129 = vmatpush2.msra.mxu0 0.0
  %130 = vmatprep.subr.mxu0 0.0
  %131 = vmatpush2.msra.mxu0 0.0
  %132 = vmatprep.subr.mxu0 0.0
  %133 = vmatpush2.msra.mxu0 0.0
  %134 = vmatprep.subr.mxu0 0.0
  %135 = vmatpush2.msra.mxu0 0.0
  %136 = vmatprep.subr.mxu0 0.0
  %137 = vmatpush2.msra.mxu0 0.0
  %138 = vmatprep.subr.mxu0 0.0
  %139 = vmatpush2.msra.mxu0 0.0
  %140 = vmatprep.subr.mxu0 0.0
  %141 = vmatpush2.msra.mxu0 0.0
  %142 = vmatprep.subr.mxu0 0.0
  %143 = vmatpush2.msra.mxu0 0.0
  %144 = vmatprep.subr.mxu0 0.0
  %145 = vmatpush2.msra.mxu0 0.0
  %146 = vmatprep.subr.mxu0 0.0
  %147 = vmatpush2.msra.mxu0 0.0
  %148 = vmatprep.subr.mxu0 0.0
  %149 = vmatpush2.msra.mxu0 0.0
  %150 = vmatprep.subr.mxu0 0.0
  %151 = vmatpush2.msra.mxu0 0.0
  %152 = vmatprep.subr.mxu0 0.0
  %153 = vmatpush2.msra.mxu0 0.0
  %154 = vmatprep.subr.mxu0 0.0
  %155 = vmatpush2.msra.mxu0 0.0
  %156 = vmatprep.subr.mxu0 0.0
  %157 = vmatpush2.msra.mxu0 0.0
  %158 = vmatprep.mubr.f32.mxu0 0.0
  %159 = vmatmul.mubr.f32.gmra.mxu0 %v71
  %v160 = vpop.f32.mrf.mxu0
  %v161 = vadd.f32 0.0, %v160
  %v162 = vpop.f32.mrf.mxu0
  %163 = vmatprep.mubr.f32.mxu0 0.0
  %164 = vmatmul.mubr.f32.gmra.mxu0 %v74
  %v165 = vpop.f32.mrf.mxu0
  %v166 = vadd.f32 0.0, %v165
  %v167 = vpop.f32.mrf.mxu0
  %168 = vmatprep.mubr.f32.mxu0 0.0
  %169 = vmatmul.mubr.f32.gmra.mxu0 %v77
  %v170 = vpop.f32.mrf.mxu0
  %v171 = vadd.f32 0.0, %v170
  %v172 = vpop.f32.mrf.mxu0
  %173 = vmatprep.mubr.f32.mxu0 0.0
  %174 = vmatmul.mubr.f32.gmra.mxu0 %v80
  %v175 = vpop.f32.mrf.mxu0
  %v176 = vadd.f32 0.0, %v175
  %v177 = vpop.f32.mrf.mxu0
  %178 = vmatprep.mubr.f32.mxu0 0.0
  %179 = vmatmul.mubr.f32.gmra.mxu0 %v83
  %v180 = vpop.f32.mrf.mxu0
  %v181 = vadd.f32 0.0, %v180
  %v182 = vpop.f32.mrf.mxu0
  %183 = vmatprep.mubr.f32.mxu0 0.0
  %184 = vmatmul.mubr.f32.gmra.mxu0 %v86
  %v185 = vpop.f32.mrf.mxu0
  %v186 = vadd.f32 0.0, %v185
  %v187 = vpop.f32.mrf.mxu0
  %188 = vmatprep.mubr.f32.mxu0 0.0
  %189 = vmatmul.mubr.f32.gmra.mxu0 %v89
  %v190 = vpop.f32.mrf.mxu0
  %v191 = vadd.f32 0.0, %v190
  %v192 = vpop.f32.mrf.mxu0
  %193 = vmatprep.mubr.f32.mxu0 0.0
  %194 = vmatmul.mubr.f32.gmra.mxu0 %v92
  %v195 = vpop.f32.mrf.mxu0
  %v196 = vadd.f32 0.0, %v195
  %v197 = vpop.f32.mrf.mxu0
  %198 = vdwg.mxu0
  %199 = vst.msk [vmem:[%s2] sm:$0xff] %vm69, %v161
  %200 = vst.msk [vmem:[%s2 + $0x8] sm:$0xff] %vm69, %v166
  %201 = vst.msk [vmem:[%s2 + $0x10] sm:$0xff] %vm69, %v171
  %202 = vst.msk [vmem:[%s2 + $0x18] sm:$0xff] %vm69, %v176
  %203 = vst.msk [vmem:[%s2 + $0x20] sm:$0xff] %vm69, %v181
  %204 = vst.msk [vmem:[%s2 + $0x28] sm:$0xff] %vm69, %v186
  %205 = vst.msk [vmem:[%s2 + $0x30] sm:$0xff] %vm69, %v191
  %206 = vst.msk [vmem:[%s2 + $0x38] sm:$0xff] %vm69, %v196
  %v208 = vsel %vm69, %v59, 0
  %v211 = vsel %vm69, %v60, 0
  %v214 = vsel %vm69, %v61, 0
  %v217 = vsel %vm69, %v62, 0
  %v220 = vsel %vm69, %v63, 0
  %v223 = vsel %vm69, %v64, 0
  %v226 = vsel %vm69, %v65, 0
  %v229 = vsel %vm69, %v66, 0
  %231 = vmatprep.subr.mxu0 0.0
  %232 = vmatpush1.msra.mxu0 0.0
  %233 = vmatprep.subr.mxu0 0.0
  %234 = vmatpush1.msra.mxu0 0.0
  %235 = vmatprep.subr.mxu0 0.0
  %236 = vmatpush1.msra.mxu0 0.0
  %237 = vmatprep.subr.mxu0 0.0
  %238 = vmatpush1.msra.mxu0 0.0
  %239 = vmatprep.subr.mxu0 0.0
  %240 = vmatpush1.msra.mxu0 0.0
  %241 = vmatprep.subr.mxu0 0.0
  %242 = vmatpush1.msra.mxu0 0.0
  %243 = vmatprep.subr.mxu0 0.0
  %244 = vmatpush1.msra.mxu0 0.0
  %245 = vmatprep.subr.mxu0 0.0
  %246 = vmatpush1.msra.mxu0 0.0
  %247 = vmatprep.subr.mxu0 0.0
  %248 = vmatpush1.msra.mxu0 0.0
  %249 = vmatprep.subr.mxu0 0.0
  %250 = vmatpush1.msra.mxu0 0.0
  %251 = vmatprep.subr.mxu0 0.0
  %252 = vmatpush1.msra.mxu0 0.0
  %253 = vmatprep.subr.mxu0 0.0
  %254 = vmatpush1.msra.mxu0 0.0
  %255 = vmatprep.subr.mxu0 0.0
  %256 = vmatpush1.msra.mxu0 0.0
  %257 = vmatprep.subr.mxu0 0.0
  %258 = vmatpush1.msra.mxu0 0.0
  %259 = vmatprep.subr.mxu0 0.0
  %260 = vmatpush1.msra.mxu0 %v68
  %261 = vmatprep.subr.mxu0 0.0
  %262 = vmatpush1.msra.mxu0 %v67
  %263 = vmatprep.subr.mxu0 0.0
  %264 = vmatpush2.msra.mxu0 0.0
  %265 = vmatprep.subr.mxu0 0.0
  %266 = vmatpush2.msra.mxu0 0.0
  %267 = vmatprep.subr.mxu0 0.0
  %268 = vmatpush2.msra.mxu0 0.0
  %269 = vmatprep.subr.mxu0 0.0
  %270 = vmatpush2.msra.mxu0 0.0
  %271 = vmatprep.subr.mxu0 0.0
  %272 = vmatpush2.msra.mxu0 0.0
  %273 = vmatprep.subr.mxu0 0.0
  %274 = vmatpush2.msra.mxu0 0.0
  %275 = vmatprep.subr.mxu0 0.0
  %276 = vmatpush2.msra.mxu0 0.0
  %277 = vmatprep.subr.mxu0 0.0
  %278 = vmatpush2.msra.mxu0 0.0
  %279 = vmatprep.subr.mxu0 0.0
  %280 = vmatpush2.msra.mxu0 0.0
  %281 = vmatprep.subr.mxu0 0.0
  %282 = vmatpush2.msra.mxu0 0.0
  %283 = vmatprep.subr.mxu0 0.0
  %284 = vmatpush2.msra.mxu0 0.0
  %285 = vmatprep.subr.mxu0 0.0
  %286 = vmatpush2.msra.mxu0 0.0
  %287 = vmatprep.subr.mxu0 0.0
  %288 = vmatpush2.msra.mxu0 0.0
  %289 = vmatprep.subr.mxu0 0.0
  %290 = vmatpush2.msra.mxu0 0.0
  %291 = vmatprep.subr.mxu0 0.0
  %292 = vmatpush2.msra.mxu0 0.0
  %293 = vmatprep.subr.mxu0 0.0
  %294 = vmatpush2.msra.mxu0 0.0
  %295 = vmatprep.mubr.f32.mxu0 0.0
  %296 = vmatmul.mubr.f32.gmra.mxu0 %v208
  %v297 = vpop.f32.mrf.mxu0
  %v298 = vadd.f32 0.0, %v297
  %v299 = vpop.f32.mrf.mxu0
  %300 = vmatprep.mubr.f32.mxu0 0.0
  %301 = vmatmul.mubr.f32.gmra.mxu0 %v211
  %v302 = vpop.f32.mrf.mxu0
  %v303 = vadd.f32 0.0, %v302
  %v304 = vpop.f32.mrf.mxu0
  %305 = vmatprep.mubr.f32.mxu0 0.0
  %306 = vmatmul.mubr.f32.gmra.mxu0 %v214
  %v307 = vpop.f32.mrf.mxu0
  %v308 = vadd.f32 0.0, %v307
  %v309 = vpop.f32.mrf.mxu0
  %310 = vmatprep.mubr.f32.mxu0 0.0
  %311 = vmatmul.mubr.f32.gmra.mxu0 %v217
  %v312 = vpop.f32.mrf.mxu0
  %v313 = vadd.f32 0.0, %v312
  %v314 = vpop.f32.mrf.mxu0
  %315 = vmatprep.mubr.f32.mxu0 0.0
  %316 = vmatmul.mubr.f32.gmra.mxu0 %v220
  %v317 = vpop.f32.mrf.mxu0
  %v318 = vadd.f32 0.0, %v317
  %v319 = vpop.f32.mrf.mxu0
  %320 = vmatprep.mubr.f32.mxu0 0.0
  %321 = vmatmul.mubr.f32.gmra.mxu0 %v223
  %v322 = vpop.f32.mrf.mxu0
  %v323 = vadd.f32 0.0, %v322
  %v324 = vpop.f32.mrf.mxu0
  %325 = vmatprep.mubr.f32.mxu0 0.0
  %326 = vmatmul.mubr.f32.gmra.mxu0 %v226
  %v327 = vpop.f32.mrf.mxu0
  %v328 = vadd.f32 0.0, %v327
  %v329 = vpop.f32.mrf.mxu0
  %330 = vmatprep.mubr.f32.mxu0 0.0
  %331 = vmatmul.mubr.f32.gmra.mxu0 %v229
  %v332 = vpop.f32.mrf.mxu0
  %v333 = vadd.f32 0.0, %v332
  %v334 = vpop.f32.mrf.mxu0
  %335 = vdwg.mxu0
  %344 = vrot.lane.b32.xlu0 %v298, 16
  %v345 = vpop.permute.xlu0 %344
  %346 = vrot.lane.b32.xlu0 %v303, 16
  %v347 = vpop.permute.xlu0 %346
  %348 = vrot.lane.b32.xlu0 %v308, 16
  %v349 = vpop.permute.xlu0 %348
  %350 = vrot.lane.b32.xlu0 %v313, 16
  %v351 = vpop.permute.xlu0 %350
  %352 = vrot.lane.b32.xlu0 %v318, 16
  %v353 = vpop.permute.xlu0 %352
  %354 = vrot.lane.b32.xlu0 %v323, 16
  %v355 = vpop.permute.xlu0 %354
  %356 = vrot.lane.b32.xlu0 %v328, 16
  %v357 = vpop.permute.xlu0 %356
  %358 = vrot.lane.b32.xlu0 %v333, 16
  %v359 = vpop.permute.xlu0 %358
  %vm368 = vcmask 261248
  %369 = vst.msk [vmem:[%s2] sm:$0xff] %vm368, %v345
  %370 = vst.msk [vmem:[%s2 + $0x8] sm:$0xff] %vm368, %v347
  %371 = vst.msk [vmem:[%s2 + $0x10] sm:$0xff] %vm368, %v349
  %372 = vst.msk [vmem:[%s2 + $0x18] sm:$0xff] %vm368, %v351
  %373 = vst.msk [vmem:[%s2 + $0x20] sm:$0xff] %vm368, %v353
  %374 = vst.msk [vmem:[%s2 + $0x28] sm:$0xff] %vm368, %v355
  %375 = vst.msk [vmem:[%s2 + $0x30] sm:$0xff] %vm368, %v357
  %376 = vst.msk [vmem:[%s2 + $0x38] sm:$0xff] %vm368, %v359
  // Predicated region
  $region10: #{tpu_custom_call.1} parent=0 // pred_check
    _
  $region11: #{tpu_custom_call.1} parent=0 // pred_check_branch
    %378 = sbr.rel (0) target = $region13
  $region12: #{tpu_custom_call.1} parent=0 // pred_region
    _
  $region13: #{tpu_custom_call.1} parent=0 // pred_fallthru
    _
  // Predicated region
  $region14: #{tpu_custom_call.1} parent=0 // pred_check
    _
  $region15: #{tpu_custom_call.1} parent=0 // pred_check_branch
    %380 = sbr.rel (0) target = $region17
  $region16: #{tpu_custom_call.1} parent=0 // pred_region
    _
  $region17: #{tpu_custom_call.1} parent=0 // pred_fallthru
    _

</llo_original>
